<compile_context>
chip_gen: v5e
topology: v5e:2x2
jax: 0.10.0
libtpu: 0.0.40
codegen_flags: <defaults>
</compile_context>

<pallas_src>
import functools

import jax
import jax.numpy as jnp
from jax.experimental import pallas as pl
from jax.experimental.pallas import tpu as pltpu

LN_EPS = 1e-5     # nn.LayerNorm default
BN_EPS = 1e-5     # nn.BatchNorm1d default
L2_EPS = 1e-12    # F.normalize default


def _round_up(n, m):
    return ((n + m - 1) // m) * m


def _pad2(a, rows, cols):
    """Zero-pad a 2-D array only along axes that actually need it."""
    pr, pc = rows - a.shape[0], cols - a.shape[1]
    if pr == 0 and pc == 0:
        return a
    return jnp.pad(a, ((0, pr), (0, pc)))


def _vmem_budget_bytes():
    """Per-generation scoped-VMEM budget (~3/4 of physical VMEM)."""
    cap = None
    try:
        cap = int(pltpu.get_tpu_info().vmem_capacity_bytes)
    except Exception:
        cap = None
    if not cap or cap <= 0:
        kind = ""
        try:
            kind = jax.devices()[0].device_kind.lower()
        except Exception:
            pass
        if any(t in kind for t in ("v4", "v5", "v6")):
            cap = 128 * 1024 * 1024
        elif any(t in kind for t in ("v2", "v3")):
            cap = 16 * 1024 * 1024
        else:
            cap = 64 * 1024 * 1024      # v7x / unknown: be conservative
    return max((cap * 3) // 4, 8 * 1024 * 1024)


def _pick_tm(batch, d_in_p, h_p, d_out_p, vmem_limit):
    """Largest batch-tile whose pipeline buffers + resident weights fit VMEM."""
    resident = ((d_in_p * h_p + h_p * d_out_p) * 2            # bf16 weights, 1 buffer
                + (2 * d_in_p + 3 * h_p + d_out_p) * 4)       # per-feature vectors
    # Per-row pipeline bytes, worst of the two passes (incl. f32 in-kernel temps).
    p1 = 2 * d_in_p * 4 + 2 * h_p * 2 + 2 * d_in_p * 4        # x in + h out + xn temp
    p2 = 3 * h_p * 2 + 2 * d_out_p * 4 + 2 * h_p * 4          # h in + out + hn temp
    per_row = max(p1, p2)
    budget = vmem_limit - resident - 4 * 1024 * 1024          # misc slack
    tm = 16
    for cand in (1024, 512, 256, 128, 64, 32):
        if cand * per_row <= budget:
            tm = cand
            break
    if batch < tm:
        tm = _round_up(batch, 16)       # bf16 h tiles: sublane multiple of 16
    return tm


# --------------------------- pass 1 ------------------------------------------
def _ln_linear1_kernel(x_ref, ln_g_ref, ln_b_ref, w1_ref, b1_ref,
                       h_ref, stats_ref, *, d_in, batch, tm):
    """LayerNorm -> Linear1 for one batch tile + per-tile BN partial sums."""
    x = x_ref[...].astype(jnp.float32)                        # (tm, D_in_p)

    # LayerNorm over the true feature width d_in. Padded columns are zero, so
    # plain sums give the correct mean and E[x^2]. Single-pass variance
    # (E[x^2]-mu^2) keeps padded columns cost-free; clamp guards the rare f32
    # cancellation when |mu| >> spread.
    inv_d = jnp.float32(1.0 / d_in)
    mu = jnp.sum(x, axis=-1, keepdims=True) * inv_d
    ex2 = jnp.sum(x * x, axis=-1, keepdims=True) * inv_d
    var = jnp.maximum(ex2 - mu * mu, 0.0)
    xn = (x - mu) * jax.lax.rsqrt(var + LN_EPS) * ln_g_ref[...] + ln_b_ref[...]

    # Linear 1 on the MXU: bf16 operands, f32 accumulation.
    h = jnp.dot(xn.astype(jnp.bfloat16), w1_ref[...],
                preferred_element_type=jnp.float32) + b1_ref[...]
    # bf16 intermediate: halves the h HBM round trip that pass 2 re-reads.
    h_ref[...] = h.astype(jnp.bfloat16)                       # (tm, H_p)

    # Per-tile BatchNorm partial statistics from the f32 accumulator; rows past
    # the true batch are zeroed with a select so they can never contaminate.
    row = jax.lax.broadcasted_iota(jnp.int32, (tm, 1), 0) + pl.program_id(0) * tm
    hm = jnp.where(row < batch, h, 0.0)
    psum = jnp.sum(hm, axis=0, keepdims=True)                 # (1, H_p)
    psq = jnp.sum(hm * hm, axis=0, keepdims=True)             # (1, H_p)
    rid = jax.lax.broadcasted_iota(jnp.int32, (2, psum.shape[-1]), 0)
    stats_ref[0] = jnp.where(rid == 0, psum, psq)             # row0=sum, row1=sumsq


# --------------------------- pass 2 ------------------------------------------
def _bn_relu_linear2_norm_kernel(h_ref, scale_ref, shift_ref, w2_ref, b2_ref,
                                 out_ref):
    """BatchNorm (folded scale/shift) -> ReLU -> Linear2 -> row L2-normalize."""
    h = h_ref[...].astype(jnp.float32)                        # bf16 -> f32
    hn = jnp.maximum(h * scale_ref[...] + shift_ref[...], 0.0)
    y = jnp.dot(hn.astype(jnp.bfloat16), w2_ref[...],
                preferred_element_type=jnp.float32) + b2_ref[...]
    sumsq = jnp.sum(y * y, axis=-1, keepdims=True)
    inv = jax.lax.rsqrt(jnp.maximum(sumsq, L2_EPS * L2_EPS))  # == 1/max(|y|, eps)
    out_ref[...] = (y * inv).astype(out_ref.dtype)


# --------------------------- padded forward -----------------------------------
def _forward_padded(x_p, ln_g_p, ln_b_p, w1_p, b1_p, bn_g_p, bn_b_p, w2_p, b2_p,
                    *, batch, d_in, tm, vmem_limit, buffer_hints):
    B_p, D_in_p = x_p.shape
    H_p = w1_p.shape[1]
    D_out_p = w2_p.shape[1]
    G = B_p // tm
    f32, bf16 = jnp.float32, jnp.bfloat16

    def spec(shape, index_map, bufs=None):
        """BlockSpec with an optional buffer-count hint (dropped if unsupported)."""
        if buffer_hints and bufs is not None and hasattr(pl, "Buffered"):
            try:
                return pl.BlockSpec(shape, index_map, pipeline_mode=pl.Buffered(bufs))
            except TypeError:
                pass
        return pl.BlockSpec(shape, index_map)

    const2 = lambda i: (0, 0)                     # resident weights / vectors
    cparams = pltpu.CompilerParams(
        dimension_semantics=("parallel",),        # megacore-shard batch tiles
        vmem_limit_bytes=int(vmem_limit),
    )

    # ---- pass 1: LayerNorm + Linear1 + per-tile BN partial sums -------------
    h, stats = pl.pallas_call(
        functools.partial(_ln_linear1_kernel, d_in=d_in, batch=batch, tm=tm),
        grid=(G,),
        in_specs=[
            pl.BlockSpec((tm, D_in_p), lambda i: (i, 0)),   # x tile (streamed)
            spec((1, D_in_p), const2, bufs=1),              # ln gamma (resident)
            spec((1, D_in_p), const2, bufs=1),              # ln beta
            spec((D_in_p, H_p), const2, bufs=1),            # W1 bf16 (resident)
            spec((1, H_p), const2, bufs=1),                 # b1
        ],
        out_specs=[
            pl.BlockSpec((tm, H_p), lambda i: (i, 0)),      # h tile (bf16)
            pl.BlockSpec((1, 2, H_p), lambda i: (i, 0, 0)), # per-tile BN stats
        ],
        out_shape=[
            jax.ShapeDtypeStruct((B_p, H_p), bf16),
            jax.ShapeDtypeStruct((G, 2, H_p), f32),
        ],
        compiler_params=cparams,
    )(x_p, ln_g_p, ln_b_p, w1_p, b1_p)

    # ---- full-batch BN statistics (tiny reduction), folded into scale/shift --
    mean = jnp.sum(stats[:, 0, :], axis=0) / batch                      # (H_p,)
    var = jnp.maximum(jnp.sum(stats[:, 1, :], axis=0) / batch - mean * mean, 0.0)
    scale = bn_g_p * jax.lax.rsqrt(var + BN_EPS)                        # (1, H_p)
    shift = bn_b_p - mean * scale                                       # (1, H_p)

    # ---- pass 2: BN + ReLU + Linear2 + L2 normalize --------------------------
    out = pl.pallas_call(
        _bn_relu_linear2_norm_kernel,
        grid=(G,),
        in_specs=[
            spec((tm, H_p), lambda i: (i, 0), bufs=3),      # h tile (bf16, deep pipe)
            spec((1, H_p), const2, bufs=1),                 # BN scale (resident)
            spec((1, H_p), const2, bufs=1),                 # BN shift
            spec((H_p, D_out_p), const2, bufs=1),           # W2 bf16 (resident)
            spec((1, D_out_p), const2, bufs=1),             # b2
        ],
        out_specs=pl.BlockSpec((tm, D_out_p), lambda i: (i, 0)),
        out_shape=jax.ShapeDtypeStruct((B_p, D_out_p), f32),
        compiler_params=cparams,
    )(h, scale, shift, w2_p, b2_p)
    return out


# --------------------------- wrapper ------------------------------------------
def projection_head(x, ln_g, ln_b, w1_t, b1, bn_g, bn_b, w2_t, b2):
    """x: (B, D_in). Linear weights pre-transposed: w1_t (D_in, H), w2_t (H, D_out).
    Returns (B, D_out) f32 with L2-normalized rows (F.normalize(dim=1))."""
    B, D_in = x.shape
    H = w1_t.shape[1]
    D_out = w2_t.shape[1]

    # Lane-dense feature padding; sublane-aligned batch tiling.
    D_in_p = _round_up(D_in, 128)
    H_p = _round_up(H, 128)
    D_out_p = _round_up(D_out, 128)
    vmem_limit = _vmem_budget_bytes()
    tm = _pick_tm(B, D_in_p, H_p, D_out_p, vmem_limit)
    B_p = _round_up(B, tm)

    f32, bf16 = jnp.float32, jnp.bfloat16
    x_p = _pad2(x.astype(f32), B_p, D_in_p)
    ln_g_p = _pad2(ln_g.reshape(1, D_in).astype(f32), 1, D_in_p)
    ln_b_p = _pad2(ln_b.reshape(1, D_in).astype(f32), 1, D_in_p)
    w1_p = _pad2(w1_t.astype(bf16), D_in_p, H_p)
    b1_p = _pad2(b1.reshape(1, H).astype(f32), 1, H_p)
    bn_g_p = _pad2(bn_g.reshape(1, H).astype(f32), 1, H_p)
    bn_b_p = _pad2(bn_b.reshape(1, H).astype(f32), 1, H_p)
    w2_p = _pad2(w2_t.astype(bf16), H_p, D_out_p)
    b2_p = _pad2(b2.reshape(1, D_out).astype(f32), 1, D_out_p)

    args = (x_p, ln_g_p, ln_b_p, w1_p, b1_p, bn_g_p, bn_b_p, w2_p, b2_p)
    kwargs = dict(batch=B, d_in=D_in, tm=tm, vmem_limit=vmem_limit)
    try:
        out = _forward_padded(*args, buffer_hints=True, **kwargs)
    except Exception:
        # Buffer-count hints rejected by this JAX/libtpu build -> default buffering.
        out = _forward_padded(*args, buffer_hints=False, **kwargs)
    return out[:B, :D_out]


# --------------------------- reference ----------------------------------------
def projection_head_ref(x, ln_g, ln_b, w1_t, b1, bn_g, bn_b, w2_t, b2):
    """Pure-f32 JAX reference faithful to the PyTorch module (train-mode BN)."""
    mu = jnp.mean(x, axis=-1, keepdims=True)
    var = jnp.mean((x - mu) ** 2, axis=-1, keepdims=True)
    xn = (x - mu) / jnp.sqrt(var + LN_EPS) * ln_g.reshape(1, -1) + ln_b.reshape(1, -1)
    h = xn @ w1_t + b1.reshape(1, -1)
    bmu = jnp.mean(h, axis=0, keepdims=True)
    bvar = jnp.mean((h - bmu) ** 2, axis=0, keepdims=True)
    hn = (h - bmu) / jnp.sqrt(bvar + BN_EPS) * bn_g.reshape(1, -1) + bn_b.reshape(1, -1)
    hn = jnp.maximum(hn, 0.0)
    y = hn @ w2_t + b2.reshape(1, -1)
    n = jnp.maximum(jnp.sqrt(jnp.sum(y * y, axis=-1, keepdims=True)), L2_EPS)
    return y / n


if __name__ == "__main__":
    # Small shapes consistent with the module: (batch, input_dim)
    B, D_IN, HID, D_OUT = 8, 32, 64, 16

    key = jax.random.PRNGKey(0)
    kx, k1, k2, k3, k4 = jax.random.split(key, 5)

    x = jax.random.normal(kx, (B, D_IN), dtype=jnp.float32)

    # Deterministic parameter init (synthetic, not a checkpoint load).
    ln_g = jnp.ones((1, D_IN), jnp.float32)                   # LayerNorm weight
    ln_b = jnp.zeros((1, D_IN), jnp.float32)                  # LayerNorm bias
    w1_t = jax.random.normal(k1, (D_IN, HID), jnp.float32) * (1.0 / jnp.sqrt(D_IN))
    b1 = jax.random.normal(k2, (1, HID), jnp.float32) * 0.01
    bn_g = jnp.ones((1, HID), jnp.float32)                    # BatchNorm weight
    bn_b = jnp.zeros((1, HID), jnp.float32)                   # BatchNorm bias
    w2_t = jax.random.normal(k3, (HID, D_OUT), jnp.float32) * (1.0 / jnp.sqrt(HID))
    b2 = jax.random.normal(k4, (1, D_OUT), jnp.float32) * 0.01

    out = projection_head(x, ln_g, ln_b, w1_t, b1, bn_g, bn_b, w2_t, b2)
    out = jax.block_until_ready(out)

    ref = projection_head_ref(x, ln_g, ln_b, w1_t, b1, bn_g, bn_b, w2_t, b2)
    assert out.shape == (B, D_OUT)
    # bf16 matmul operands + bf16 h intermediate (f32 accumulation) => looser tol
    assert jnp.allclose(out, ref, atol=5e-2, rtol=5e-2), "mismatch vs JAX reference"
    # rows are unit-norm
    assert jnp.allclose(jnp.linalg.norm(out, axis=1), 1.0, atol=1e-3)

    # TODO(synk): BatchNorm1d running-stat update / eval-mode path not implemented
    # (training-mode batch statistics only, matching a fresh nn.Module).
    print("KERNEL_OK")
</pallas_src>

<mosaic_0001>
module attributes {stable_mosaic.version = 11 : i64} {
  func.func @_ln_linear1_kernel(%arg0: i32, %arg1: memref<16x128xf32, #tpu.memory_space<vmem>>, %arg2: memref<1x128xf32, #tpu.memory_space<vmem>>, %arg3: memref<1x128xf32, #tpu.memory_space<vmem>>, %arg4: memref<128x128xbf16, #tpu.memory_space<vmem>>, %arg5: memref<1x128xf32, #tpu.memory_space<vmem>>, %arg6: memref<16x128xbf16, #tpu.memory_space<vmem>>, %arg7: memref<1x2x128xf32, #tpu.memory_space<vmem>>) attributes {dimension_semantics = [#tpu.dimension_semantics<parallel>], iteration_bounds = array<i64: 1>, scalar_prefetch = 0 : i64, scratch_operands = 0 : i64, tpu.core_type = #tpu.core_type<tc>, window_params = [{transform_indices = @transform_0, window_bounds = array<i64: 16, 128>}, {pipeline_mode = #tpu.pipeline_mode<synchronous>, transform_indices = @transform_1, window_bounds = array<i64: 1, 128>}, {pipeline_mode = #tpu.pipeline_mode<synchronous>, transform_indices = @transform_2, window_bounds = array<i64: 1, 128>}, {pipeline_mode = #tpu.pipeline_mode<synchronous>, transform_indices = @transform_3, window_bounds = array<i64: 128, 128>}, {pipeline_mode = #tpu.pipeline_mode<synchronous>, transform_indices = @transform_4, window_bounds = array<i64: 1, 128>}, {transform_indices = @transform_5, window_bounds = array<i64: 16, 128>}, {transform_indices = @transform_6, window_bounds = array<i64: 1, 2, 128>}]} {
    %c0 = arith.constant 0 : index
    %c0_0 = arith.constant 0 : index
    %0 = vector.load %arg1[%c0, %c0_0] : memref<16x128xf32, #tpu.memory_space<vmem>>, vector<16x128xf32>
    %cst = arith.constant dense<0.000000e+00> : vector<16xf32>
    %1 = vector.multi_reduction <add>, %0, %cst [1] : vector<16x128xf32> to vector<16xf32>
    %2 = vector.shape_cast %1 : vector<16xf32> to vector<16x1xf32>
    %cst_1 = arith.constant 3.125000e-02 : f32
    %3 = vector.broadcast %cst_1 : f32 to vector<16x1xf32>
    %4 = arith.mulf %2, %3 : vector<16x1xf32>
    %5 = arith.mulf %0, %0 : vector<16x128xf32>
    %cst_2 = arith.constant dense<0.000000e+00> : vector<16xf32>
    %6 = vector.multi_reduction <add>, %5, %cst_2 [1] : vector<16x128xf32> to vector<16xf32>
    %7 = vector.shape_cast %6 : vector<16xf32> to vector<16x1xf32>
    %cst_3 = arith.constant 3.125000e-02 : f32
    %8 = vector.broadcast %cst_3 : f32 to vector<16x1xf32>
    %9 = arith.mulf %7, %8 : vector<16x1xf32>
    %10 = arith.mulf %4, %4 : vector<16x1xf32>
    %11 = arith.subf %9, %10 : vector<16x1xf32>
    %cst_4 = arith.constant 0.000000e+00 : f32
    %12 = vector.broadcast %cst_4 : f32 to vector<16x1xf32>
    %13 = arith.maximumf %11, %12 : vector<16x1xf32>
    %14 = vector.broadcast %4 : vector<16x1xf32> to vector<16x128xf32>
    %15 = arith.subf %0, %14 : vector<16x128xf32>
    %cst_5 = arith.constant 9.99999974E-6 : f32
    %16 = vector.broadcast %cst_5 : f32 to vector<16x1xf32>
    %17 = arith.addf %13, %16 : vector<16x1xf32>
    %18 = math.rsqrt %17 : vector<16x1xf32>
    %19 = vector.broadcast %18 : vector<16x1xf32> to vector<16x128xf32>
    %20 = arith.mulf %15, %19 : vector<16x128xf32>
    %c0_6 = arith.constant 0 : index
    %c0_7 = arith.constant 0 : index
    %21 = vector.load %arg2[%c0_6, %c0_7] : memref<1x128xf32, #tpu.memory_space<vmem>>, vector<1x128xf32>
    %22 = vector.broadcast %21 : vector<1x128xf32> to vector<16x128xf32>
    %23 = arith.mulf %20, %22 : vector<16x128xf32>
    %c0_8 = arith.constant 0 : index
    %c0_9 = arith.constant 0 : index
    %24 = vector.load %arg3[%c0_8, %c0_9] : memref<1x128xf32, #tpu.memory_space<vmem>>, vector<1x128xf32>
    %25 = vector.broadcast %24 : vector<1x128xf32> to vector<16x128xf32>
    %26 = arith.addf %23, %25 : vector<16x128xf32>
    %27 = arith.truncf %26 : vector<16x128xf32> to vector<16x128xbf16>
    %c0_10 = arith.constant 0 : index
    %c0_11 = arith.constant 0 : index
    %28 = vector.load %arg4[%c0_10, %c0_11] : memref<128x128xbf16, #tpu.memory_space<vmem>>, vector<128x128xbf16>
    %cst_12 = arith.constant dense<0.000000e+00> : vector<16x128xf32>
    %29 = tpu.matmul %27, %28, %cst_12 {dimension_numbers = #tpu.dot_dimension_numbers<[1], [0], [0], [1], [0, 0, 1, 1], [], []>} : vector<16x128xbf16>, vector<128x128xbf16>, vector<16x128xf32> -> vector<16x128xf32>
    %c0_13 = arith.constant 0 : index
    %c0_14 = arith.constant 0 : index
    %30 = vector.load %arg5[%c0_13, %c0_14] : memref<1x128xf32, #tpu.memory_space<vmem>>, vector<1x128xf32>
    %31 = vector.broadcast %30 : vector<1x128xf32> to vector<16x128xf32>
    %32 = arith.addf %29, %31 : vector<16x128xf32>
    %33 = arith.truncf %32 : vector<16x128xf32> to vector<16x128xbf16>
    %c0_15 = arith.constant 0 : index
    %c0_16 = arith.constant 0 : index
    %34 = vector.load %arg6[%c0_15, %c0_16] : memref<16x128xbf16, #tpu.memory_space<vmem>>, vector<16x128xbf16>
    tpu.vector_store %arg6[%c0_15, %c0_16], %33 {strides = array<i32>} : memref<16x128xbf16, #tpu.memory_space<vmem>>, vector<16x128xbf16>,
    %35 = tpu.iota {dimensions = array<i32: 0>} : vector<16x1xi32>
    %c16_i32 = arith.constant 16 : i32
    %36 = arith.muli %arg0, %c16_i32 : i32
    %37 = vector.broadcast %36 : i32 to vector<16x1xi32>
    %38 = arith.addi %35, %37 : vector<16x1xi32>
    %c8_i32 = arith.constant 8 : i32
    %39 = vector.broadcast %c8_i32 : i32 to vector<16x1xi32>
    %40 = arith.cmpi slt, %38, %39 : vector<16x1xi32>
    %cst_17 = arith.constant 0.000000e+00 : f32
    %41 = vector.shape_cast %40 : vector<16x1xi1> to vector<16x1xi1>
    %42 = vector.broadcast %41 : vector<16x1xi1> to vector<16x128xi1>
    %43 = vector.broadcast %cst_17 : f32 to vector<16x128xf32>
    %44 = arith.select %42, %32, %43 : vector<16x128xi1>, vector<16x128xf32>
    %cst_18 = arith.constant dense<0.000000e+00> : vector<128xf32>
    %45 = vector.multi_reduction <add>, %44, %cst_18 [0] : vector<16x128xf32> to vector<128xf32>
    %46 = vector.shape_cast %45 : vector<128xf32> to vector<1x128xf32>
    %47 = arith.mulf %44, %44 : vector<16x128xf32>
    %cst_19 = arith.constant dense<0.000000e+00> : vector<128xf32>
    %48 = vector.multi_reduction <add>, %47, %cst_19 [0] : vector<16x128xf32> to vector<128xf32>
    %49 = vector.shape_cast %48 : vector<128xf32> to vector<1x128xf32>
    %50 = tpu.iota {dimensions = array<i32: 0>} : vector<2x128xi32>
    %c0_i32 = arith.constant 0 : i32
    %51 = vector.broadcast %c0_i32 : i32 to vector<2x128xi32>
    %52 = arith.cmpi eq, %50, %51 : vector<2x128xi32>
    %53 = vector.shape_cast %46 : vector<1x128xf32> to vector<1x128xf32>
    %54 = vector.broadcast %53 : vector<1x128xf32> to vector<2x128xf32>
    %55 = vector.shape_cast %49 : vector<1x128xf32> to vector<1x128xf32>
    %56 = vector.broadcast %55 : vector<1x128xf32> to vector<2x128xf32>
    %57 = arith.select %52, %54, %56 : vector<2x128xi1>, vector<2x128xf32>
    %c0_20 = arith.constant 0 : index
    %c0_21 = arith.constant 0 : index
    %c0_22 = arith.constant 0 : index
    %58 = vector.load %arg7[%c0_20, %c0_21, %c0_22] : memref<1x2x128xf32, #tpu.memory_space<vmem>>, vector<1x2x128xf32>
    %59 = vector.shape_cast %58 : vector<1x2x128xf32> to vector<2x128xf32>
    %60 = vector.shape_cast %57 : vector<2x128xf32> to vector<1x2x128xf32>
    tpu.vector_store %arg7[%c0_20, %c0_21, %c0_22], %60 {strides = array<i32>} : memref<1x2x128xf32, #tpu.memory_space<vmem>>, vector<1x2x128xf32>,
    return
  }
  func.func @transform_0(%arg0: i32) -> (i32, i32) {
    %c0_i32 = arith.constant 0 : i32
    %c0_i32_0 = arith.constant 0 : i32
    return %arg0, %c0_i32 : i32, i32
  }
  func.func @transform_1(%arg0: i32) -> (i32, i32) {
    %c0_i32 = arith.constant 0 : i32
    %c0_i32_0 = arith.constant 0 : i32
    %c0_i32_1 = arith.constant 0 : i32
    return %c0_i32, %c0_i32_0 : i32, i32
  }
  func.func @transform_2(%arg0: i32) -> (i32, i32) {
    %c0_i32 = arith.constant 0 : i32
    %c0_i32_0 = arith.constant 0 : i32
    %c0_i32_1 = arith.constant 0 : i32
    return %c0_i32, %c0_i32_0 : i32, i32
  }
  func.func @transform_3(%arg0: i32) -> (i32, i32) {
    %c0_i32 = arith.constant 0 : i32
    %c0_i32_0 = arith.constant 0 : i32
    %c0_i32_1 = arith.constant 0 : i32
    return %c0_i32, %c0_i32_0 : i32, i32
  }
  func.func @transform_4(%arg0: i32) -> (i32, i32) {
    %c0_i32 = arith.constant 0 : i32
    %c0_i32_0 = arith.constant 0 : i32
    %c0_i32_1 = arith.constant 0 : i32
    return %c0_i32, %c0_i32_0 : i32, i32
  }
  func.func @transform_5(%arg0: i32) -> (i32, i32) {
    %c0_i32 = arith.constant 0 : i32
    %c0_i32_0 = arith.constant 0 : i32
    return %arg0, %c0_i32 : i32, i32
  }
  func.func @transform_6(%arg0: i32) -> (i32, i32, i32) {
    %c0_i32 = arith.constant 0 : i32
    %c0_i32_0 = arith.constant 0 : i32
    %c0_i32_1 = arith.constant 0 : i32
    return %arg0, %c0_i32, %c0_i32_0 : i32, i32, i32
  }
}

module attributes {stable_mosaic.version = 11 : i64} {
  func.func @_ln_linear1_kernel(%arg0: i32, %arg1: memref<16x128xf32, #tpu.memory_space<vmem>>, %arg2: memref<1x128xf32, #tpu.memory_space<vmem>>, %arg3: memref<1x128xf32, #tpu.memory_space<vmem>>, %arg4: memref<128x128xbf16, #tpu.memory_space<vmem>>, %arg5: memref<1x128xf32, #tpu.memory_space<vmem>>, %arg6: memref<16x128xbf16, #tpu.memory_space<vmem>>, %arg7: memref<1x2x128xf32, #tpu.memory_space<vmem>>) attributes {dimension_semantics = [#tpu.dimension_semantics<parallel>], iteration_bounds = array<i64: 1>, scalar_prefetch = 0 : i64, scratch_operands = 0 : i64, tpu.core_type = #tpu.core_type<tc>, window_params = [{transform_indices = @transform_0, window_bounds = array<i64: 16, 128>}, {pipeline_mode = #tpu.pipeline_mode<synchronous>, transform_indices = @transform_1, window_bounds = array<i64: 1, 128>}, {pipeline_mode = #tpu.pipeline_mode<synchronous>, transform_indices = @transform_2, window_bounds = array<i64: 1, 128>}, {pipeline_mode = #tpu.pipeline_mode<synchronous>, transform_indices = @transform_3, window_bounds = array<i64: 128, 128>}, {pipeline_mode = #tpu.pipeline_mode<synchronous>, transform_indices = @transform_4, window_bounds = array<i64: 1, 128>}, {transform_indices = @transform_5, window_bounds = array<i64: 16, 128>}, {transform_indices = @transform_6, window_bounds = array<i64: 1, 2, 128>}]} {
    %c0 = arith.constant 0 : index
    %c0_0 = arith.constant 0 : index
    %0 = vector.load %arg1[%c0, %c0_0] : memref<16x128xf32, #tpu.memory_space<vmem>>, vector<16x128xf32>
    %cst = arith.constant dense<0.000000e+00> : vector<16xf32>
    %1 = vector.multi_reduction <add>, %0, %cst [1] : vector<16x128xf32> to vector<16xf32>
    %2 = vector.shape_cast %1 : vector<16xf32> to vector<16x1xf32>
    %cst_1 = arith.constant 3.125000e-02 : f32
    %3 = vector.broadcast %cst_1 : f32 to vector<16x1xf32>
    %4 = arith.mulf %2, %3 : vector<16x1xf32>
    %5 = arith.mulf %0, %0 : vector<16x128xf32>
    %cst_2 = arith.constant dense<0.000000e+00> : vector<16xf32>
    %6 = vector.multi_reduction <add>, %5, %cst_2 [1] : vector<16x128xf32> to vector<16xf32>
    %7 = vector.shape_cast %6 : vector<16xf32> to vector<16x1xf32>
    %cst_3 = arith.constant 3.125000e-02 : f32
    %8 = vector.broadcast %cst_3 : f32 to vector<16x1xf32>
    %9 = arith.mulf %7, %8 : vector<16x1xf32>
    %10 = arith.mulf %4, %4 : vector<16x1xf32>
    %11 = arith.subf %9, %10 : vector<16x1xf32>
    %cst_4 = arith.constant 0.000000e+00 : f32
    %12 = vector.broadcast %cst_4 : f32 to vector<16x1xf32>
    %13 = arith.maximumf %11, %12 : vector<16x1xf32>
    %14 = vector.broadcast %4 : vector<16x1xf32> to vector<16x128xf32>
    %15 = arith.subf %0, %14 : vector<16x128xf32>
    %cst_5 = arith.constant 9.99999974E-6 : f32
    %16 = vector.broadcast %cst_5 : f32 to vector<16x1xf32>
    %17 = arith.addf %13, %16 : vector<16x1xf32>
    %18 = math.rsqrt %17 : vector<16x1xf32>
    %19 = vector.broadcast %18 : vector<16x1xf32> to vector<16x128xf32>
    %20 = arith.mulf %15, %19 : vector<16x128xf32>
    %c0_6 = arith.constant 0 : index
    %c0_7 = arith.constant 0 : index
    %21 = vector.load %arg2[%c0_6, %c0_7] : memref<1x128xf32, #tpu.memory_space<vmem>>, vector<1x128xf32>
    %22 = vector.broadcast %21 : vector<1x128xf32> to vector<16x128xf32>
    %23 = arith.mulf %20, %22 : vector<16x128xf32>
    %c0_8 = arith.constant 0 : index
    %c0_9 = arith.constant 0 : index
    %24 = vector.load %arg3[%c0_8, %c0_9] : memref<1x128xf32, #tpu.memory_space<vmem>>, vector<1x128xf32>
    %25 = vector.broadcast %24 : vector<1x128xf32> to vector<16x128xf32>
    %26 = arith.addf %23, %25 : vector<16x128xf32>
    %27 = arith.truncf %26 : vector<16x128xf32> to vector<16x128xbf16>
    %c0_10 = arith.constant 0 : index
    %c0_11 = arith.constant 0 : index
    %28 = vector.load %arg4[%c0_10, %c0_11] : memref<128x128xbf16, #tpu.memory_space<vmem>>, vector<128x128xbf16>
    %cst_12 = arith.constant dense<0.000000e+00> : vector<16x128xf32>
    %29 = tpu.matmul %27, %28, %cst_12 {dimension_numbers = #tpu.dot_dimension_numbers<[1], [0], [0], [1], [0, 0, 1, 1], [], []>} : vector<16x128xbf16>, vector<128x128xbf16>, vector<16x128xf32> -> vector<16x128xf32>
    %c0_13 = arith.constant 0 : index
    %c0_14 = arith.constant 0 : index
    %30 = vector.load %arg5[%c0_13, %c0_14] : memref<1x128xf32, #tpu.memory_space<vmem>>, vector<1x128xf32>
    %31 = vector.broadcast %30 : vector<1x128xf32> to vector<16x128xf32>
    %32 = arith.addf %29, %31 : vector<16x128xf32>
    %33 = arith.truncf %32 : vector<16x128xf32> to vector<16x128xbf16>
    %c0_15 = arith.constant 0 : index
    %c0_16 = arith.constant 0 : index
    %34 = vector.load %arg6[%c0_15, %c0_16] : memref<16x128xbf16, #tpu.memory_space<vmem>>, vector<16x128xbf16>
    tpu.vector_store %arg6[%c0_15, %c0_16], %33 {strides = array<i32>} : memref<16x128xbf16, #tpu.memory_space<vmem>>, vector<16x128xbf16>,
    %35 = tpu.iota {dimensions = array<i32: 0>} : vector<16x1xi32>
    %c16_i32 = arith.constant 16 : i32
    %36 = arith.muli %arg0, %c16_i32 : i32
    %37 = vector.broadcast %36 : i32 to vector<16x1xi32>
    %38 = arith.addi %35, %37 : vector<16x1xi32>
    %c8_i32 = arith.constant 8 : i32
    %39 = vector.broadcast %c8_i32 : i32 to vector<16x1xi32>
    %40 = arith.cmpi slt, %38, %39 : vector<16x1xi32>
    %cst_17 = arith.constant 0.000000e+00 : f32
    %41 = vector.shape_cast %40 : vector<16x1xi1> to vector<16x1xi1>
    %42 = vector.broadcast %41 : vector<16x1xi1> to vector<16x128xi1>
    %43 = vector.broadcast %cst_17 : f32 to vector<16x128xf32>
    %44 = arith.select %42, %32, %43 : vector<16x128xi1>, vector<16x128xf32>
    %cst_18 = arith.constant dense<0.000000e+00> : vector<128xf32>
    %45 = vector.multi_reduction <add>, %44, %cst_18 [0] : vector<16x128xf32> to vector<128xf32>
    %46 = vector.shape_cast %45 : vector<128xf32> to vector<1x128xf32>
    %47 = arith.mulf %44, %44 : vector<16x128xf32>
    %cst_19 = arith.constant dense<0.000000e+00> : vector<128xf32>
    %48 = vector.multi_reduction <add>, %47, %cst_19 [0] : vector<16x128xf32> to vector<128xf32>
    %49 = vector.shape_cast %48 : vector<128xf32> to vector<1x128xf32>
    %50 = tpu.iota {dimensions = array<i32: 0>} : vector<2x128xi32>
    %c0_i32 = arith.constant 0 : i32
    %51 = vector.broadcast %c0_i32 : i32 to vector<2x128xi32>
    %52 = arith.cmpi eq, %50, %51 : vector<2x128xi32>
    %53 = vector.shape_cast %46 : vector<1x128xf32> to vector<1x128xf32>
    %54 = vector.broadcast %53 : vector<1x128xf32> to vector<2x128xf32>
    %55 = vector.shape_cast %49 : vector<1x128xf32> to vector<1x128xf32>
    %56 = vector.broadcast %55 : vector<1x128xf32> to vector<2x128xf32>
    %57 = arith.select %52, %54, %56 : vector<2x128xi1>, vector<2x128xf32>
    %c0_20 = arith.constant 0 : index
    %c0_21 = arith.constant 0 : index
    %c0_22 = arith.constant 0 : index
    %58 = vector.load %arg7[%c0_20, %c0_21, %c0_22] : memref<1x2x128xf32, #tpu.memory_space<vmem>>, vector<1x2x128xf32>
    %59 = vector.shape_cast %58 : vector<1x2x128xf32> to vector<2x128xf32>
    %60 = vector.shape_cast %57 : vector<2x128xf32> to vector<1x2x128xf32>
    tpu.vector_store %arg7[%c0_20, %c0_21, %c0_22], %60 {strides = array<i32>} : memref<1x2x128xf32, #tpu.memory_space<vmem>>, vector<1x2x128xf32>,
    return
  }
  func.func @transform_0(%arg0: i32) -> (i32, i32) {
    %c0_i32 = arith.constant 0 : i32
    %c0_i32_0 = arith.constant 0 : i32
    return %arg0, %c0_i32 : i32, i32
  }
  func.func @transform_1(%arg0: i32) -> (i32, i32) {
    %c0_i32 = arith.constant 0 : i32
    %c0_i32_0 = arith.constant 0 : i32
    %c0_i32_1 = arith.constant 0 : i32
    return %c0_i32, %c0_i32_0 : i32, i32
  }
  func.func @transform_2(%arg0: i32) -> (i32, i32) {
    %c0_i32 = arith.constant 0 : i32
    %c0_i32_0 = arith.constant 0 : i32
    %c0_i32_1 = arith.constant 0 : i32
    return %c0_i32, %c0_i32_0 : i32, i32
  }
  func.func @transform_3(%arg0: i32) -> (i32, i32) {
    %c0_i32 = arith.constant 0 : i32
    %c0_i32_0 = arith.constant 0 : i32
    %c0_i32_1 = arith.constant 0 : i32
    return %c0_i32, %c0_i32_0 : i32, i32
  }
  func.func @transform_4(%arg0: i32) -> (i32, i32) {
    %c0_i32 = arith.constant 0 : i32
    %c0_i32_0 = arith.constant 0 : i32
    %c0_i32_1 = arith.constant 0 : i32
    return %c0_i32, %c0_i32_0 : i32, i32
  }
  func.func @transform_5(%arg0: i32) -> (i32, i32) {
    %c0_i32 = arith.constant 0 : i32
    %c0_i32_0 = arith.constant 0 : i32
    return %arg0, %c0_i32 : i32, i32
  }
  func.func @transform_6(%arg0: i32) -> (i32, i32, i32) {
    %c0_i32 = arith.constant 0 : i32
    %c0_i32_0 = arith.constant 0 : i32
    %c0_i32_1 = arith.constant 0 : i32
    return %arg0, %c0_i32, %c0_i32_0 : i32, i32, i32
  }
}

</mosaic_0001>

<llo_original>
// kernel: tpu_custom_call.1
$region0: #{tpu_custom_call.1}
  #allocation0 [shape = 'u32[]', space=smem, size = 0x4, offset = 0x4, fixed_abs, tag = 'smem constant byte address 0x4 - core index']
  #allocation1 [shape = 'u32[72,128]{1,0:T(1,128)}', space=vmem, size = 0x9000, scoped, tag = 'internal scratch']
  %s0 = inlined_call_operand.hbm [shape: f32[16,128], index: 0, kind: input, shape index: {}]
  %s1 = inlined_call_operand.hbm [shape: f32[1,128], index: 1, kind: input, shape index: {}]
  %s2 = inlined_call_operand.vmem [shape: f32[1,128], index: 2, kind: input, shape index: {}]
  %s3 = inlined_call_operand.hbm [shape: bf16[128,128], index: 3, kind: input, shape index: {}]
  %s4 = inlined_call_operand.vmem [shape: f32[1,128], index: 4, kind: input, shape index: {}]
  %s5 = inlined_call_operand.hbm [shape: bf16[16,128], index: 5, kind: output, shape index: {0}]
  %s6 = inlined_call_operand.hbm [shape: f32[1,2,128], index: 6, kind: output, shape index: {1}]
  %7 = xla_tuple %s5, %s6
  %s8 = sld [smem:[#allocation0]]
  $region50: #{tpu_custom_call.1} parent=0
    _
  %s10 = ssub.s32 1, %s8
  %s11 = scalar_select 0, %s10, %s8
  $region1: #{tpu_custom_call.1} parent=0
    #allocation2 [shape = 'u8[8192]{0}', space=vmem, size = 0x2000, scoped, tag = 'input window, operand 0, single buffered']
    #allocation3 [shape = 's32[1]{0}', space=sflag, size = 0x4, scoped, tag = 'scoped memory for tpu_custom_call.1']
    #allocation4 [shape = 's32[1]{0}', space=sflag, size = 0x4, scoped, tag = 'scoped memory for tpu_custom_call.1']
    #allocation5 [shape = 'u8[512]{0}', space=vmem, size = 0x400, scoped, tag = 'input window, operand 1, single buffered']
    #allocation6 [shape = 's32[1]{0}', space=sflag, size = 0x4, scoped, tag = 'scoped memory for tpu_custom_call.1']
    #allocation7 [shape = 'u8[32768]{0}', space=vmem, size = 0x8000, scoped, tag = 'input window, operand 3, single buffered']
    #allocation8 [shape = 'u8[4096]{0}', space=vmem, size = 0x1000, scoped, tag = 'output window, operand 0, single buffered']
    #allocation9 [shape = 'u8[1024]{0}', space=vmem, size = 0x400, scoped, tag = 'output window, operand 1, single buffered']
    #allocation10 [shape = 's32[1]{0}', space=sflag, size = 0x4, scoped, tag = 'scoped memory for tpu_custom_call.1']
    %12 = vsyncpa [#allocation3], 0
    %13 = vsyncpa [#allocation6], 0
    %14 = vsyncpa [#allocation4], 0
    %15 = vsyncpa [#allocation10], 0
    // Predicated region
    $region2: #{tpu_custom_call.1} parent=1 // pred_check
      _
    $region3: #{tpu_custom_call.1} parent=1 // pred_check_branch
      %17 = sbr.rel (0) target = $region5
    $region4: #{tpu_custom_call.1} parent=1 // pred_region
      %19 = vsyncadd [#allocation3], 0
      %s20 = sshll.u32 %s0, 4
      %s21 = int_to_ptr.hbm [resolvable:$true] %s20
      %s22 = sshll.u32 [#allocation2], 4
      %s23 = int_to_ptr.vmem [resolvable:$true] %s22
      %28 = dma.hbm_to_vmem [thread:$0]  %s21, 256, %s23, [#allocation3], 128, 128, 8
    $region5: #{tpu_custom_call.1} parent=1 // pred_fallthru
      _
    // Predicated region
    $region6: #{tpu_custom_call.1} parent=1 // pred_check
      _
    $region7: #{tpu_custom_call.1} parent=1 // pred_check_branch
      %30 = sbr.rel (0) target = $region9
    $region8: #{tpu_custom_call.1} parent=1 // pred_region
      %32 = vsyncadd [#allocation6], 0
      %s34 = sshll.u32 %s1, 4
      %s35 = int_to_ptr.hbm [resolvable:$true] %s34
      %s36 = sshll.u32 [#allocation5], 4
      %s37 = int_to_ptr.vmem [resolvable:$true] %s36
      %39 = dma.hbm_to_vmem [thread:$0]  %s35, 16, %s37, [#allocation6]
    $region9: #{tpu_custom_call.1} parent=1 // pred_fallthru
      _
    // Predicated region
    $region10: #{tpu_custom_call.1} parent=1 // pred_check
      _
    $region11: #{tpu_custom_call.1} parent=1 // pred_check_branch
      %41 = sbr.rel (0) target = $region13
    $region12: #{tpu_custom_call.1} parent=1 // pred_region
      _
    $region13: #{tpu_custom_call.1} parent=1 // pred_fallthru
      _
    // Predicated region
    $region14: #{tpu_custom_call.1} parent=1 // pred_check
      _
    $region15: #{tpu_custom_call.1} parent=1 // pred_check_branch
      %43 = sbr.rel (0) target = $region17
    $region16: #{tpu_custom_call.1} parent=1 // pred_region
      %45 = vsyncadd [#allocation6], 0
      %s46 = sshll.u32 %s3, 4
      %s47 = int_to_ptr.hbm [resolvable:$true] %s46
      %s48 = sshll.u32 [#allocation7], 4
      %s49 = int_to_ptr.vmem [resolvable:$true] %s48
      %54 = dma.hbm_to_vmem [thread:$0]  %s47, 1024, %s49, [#allocation6], 64, 64, 4
    $region17: #{tpu_custom_call.1} parent=1 // pred_fallthru
      _
    // Predicated region
    $region18: #{tpu_custom_call.1} parent=1 // pred_check
      _
    $region19: #{tpu_custom_call.1} parent=1 // pred_check_branch
      %56 = sbr.rel (0) target = $region21
    $region20: #{tpu_custom_call.1} parent=1 // pred_region
      _
    $region21: #{tpu_custom_call.1} parent=1 // pred_fallthru
      _
    // Predicated region
    $region22: #{tpu_custom_call.1} parent=1 // pred_check
      _
    $region23: #{tpu_custom_call.1} parent=1 // pred_check_branch
      %58 = sbr.rel (0) target = $region25
    $region24: #{tpu_custom_call.1} parent=1 // pred_region
      %60 = dma.done [#allocation3], 256
    $region25: #{tpu_custom_call.1} parent=1 // pred_fallthru
      _
    // Predicated region
    $region26: #{tpu_custom_call.1} parent=1 // pred_check
      _
    $region27: #{tpu_custom_call.1} parent=1 // pred_check_branch
      %62 = sbr.rel (0) target = $region29
    $region28: #{tpu_custom_call.1} parent=1 // pred_region
      %64 = dma.done [#allocation6], 16
    $region29: #{tpu_custom_call.1} parent=1 // pred_fallthru
      _
    // Predicated region
    $region30: #{tpu_custom_call.1} parent=1 // pred_check
      _
    $region31: #{tpu_custom_call.1} parent=1 // pred_check_branch
      %66 = sbr.rel (0) target = $region33
    $region32: #{tpu_custom_call.1} parent=1 // pred_region
      %68 = dma.done [#allocation6], 1024
    $region33: #{tpu_custom_call.1} parent=1 // pred_fallthru
      _
    %v69 = vld [vmem:[#allocation2] sm:$0xff]
    %v70 = vld [vmem:[#allocation2 + $0x8] sm:$0xff]
    %71 = vadd.xlane.f32.xlu0 %v69
    %v72 = vpop.xlane.xlu0 %71
    %73 = vadd.xlane.f32.xlu0 %v70
    %v74 = vpop.xlane.xlu0 %73
    %v75 = vmul.f32 %v72, 0.03125
    %v76 = vmul.f32 %v74, 0.03125
    %v77 = vmul.f32 %v69, %v69
    %v78 = vmul.f32 %v70, %v70
    %79 = vadd.xlane.f32.xlu0 %v77
    %v80 = vpop.xlane.xlu0 %79
    %81 = vadd.xlane.f32.xlu0 %v78
    %v82 = vpop.xlane.xlu0 %81
    %v83 = vmul.f32 %v80, 0.03125
    %v84 = vmul.f32 %v82, 0.03125
    %v85 = vmul.f32 %v75, %v75
    %v86 = vmul.f32 %v76, %v76
    %v87 = vsub.f32 %v83, %v85
    %v88 = vsub.f32 %v84, %v86
    %v89 = vmax.f32 %v87, 0.0
    %v90 = vmax.f32 %v88, 0.0
    %v91 = vsub.f32 %v69, %v75
    %v92 = vsub.f32 %v70, %v76
    %v93 = vadd.f32 %v89, 1e-05
    %v94 = vadd.f32 %v90, 1e-05
    %v95 = vrsqrt.pop %v93
    %v96 = vmul.f32 %v95, %v93
    %v97 = vmul.f32 %v96, %v95
    %v98 = vmul.f32 0.5, %v97
    %v99 = vsub.f32 1.5, %v98
    %v100 = vmul.f32 %v95, %v99
    %vm101 = vweird.f32 %v93
    %vm102 = vweird.f32 %v95
    %vm103 = vmor %vm101, %vm102
    %v104 = vsel %vm103, %v95, %v100
    %v105 = vrsqrt.pop %v94
    %v106 = vmul.f32 %v105, %v94
    %v107 = vmul.f32 %v106, %v105
    %v108 = vmul.f32 0.5, %v107
    %v109 = vsub.f32 1.5, %v108
    %v110 = vmul.f32 %v105, %v109
    %vm111 = vweird.f32 %v94
    %vm112 = vweird.f32 %v105
    %vm113 = vmor %vm111, %vm112
    %v114 = vsel %vm113, %v105, %v110
    %v115 = vmul.f32 %v91, %v104
    %v116 = vmul.f32 %v92, %v114
    %v117 = vld [vmem:[#allocation5] sm:$0x1]
    %v119 = vperm.slane %v117, 0
    %v121 = vmul.f32 %v115, %v119
    %v122 = vmul.f32 %v116, %v119
    %v123 = vld [vmem:[%s2] sm:$0x1]
    %v125 = vperm.slane %v123, 0
    %v127 = vadd.f32 %v121, %v125
    %v128 = vadd.f32 %v122, %v125
    %v129 = vpack.c.bf16 %v128, %v127
    %v130 = vld [vmem:[#allocation7] sm:$0xf]
    %v131 = vld [vmem:[#allocation7 + $0x4] sm:$0xf]
    %v132 = vld [vmem:[#allocation7 + $0x8] sm:$0xf]
    %v133 = vld [vmem:[#allocation7 + $0xc] sm:$0xf]
    %v134 = vld [vmem:[#allocation7 + $0x10] sm:$0xf]
    %v135 = vld [vmem:[#allocation7 + $0x14] sm:$0xf]
    %v136 = vld [vmem:[#allocation7 + $0x18] sm:$0xf]
    %v137 = vld [vmem:[#allocation7 + $0x1c] sm:$0xf]
    %v138 = vld [vmem:[#allocation7 + $0x20] sm:$0xf]
    %v139 = vld [vmem:[#allocation7 + $0x24] sm:$0xf]
    %v140 = vld [vmem:[#allocation7 + $0x28] sm:$0xf]
    %v141 = vld [vmem:[#allocation7 + $0x2c] sm:$0xf]
    %v142 = vld [vmem:[#allocation7 + $0x30] sm:$0xf]
    %v143 = vld [vmem:[#allocation7 + $0x34] sm:$0xf]
    %v144 = vld [vmem:[#allocation7 + $0x38] sm:$0xf]
    %v145 = vld [vmem:[#allocation7 + $0x3c] sm:$0xf]
    %v146 = vld [vmem:[%s4] sm:$0x1]
    %v148 = vperm.slane %v146, 0
    %v166 = vunpack.c.l.b16 %v130
    %v167 = vunpack.c.l.b16 %v131
    %v168 = vunpack.c.l.b16 %v132
    %v169 = vunpack.c.l.b16 %v133
    %v170 = vunpack.c.l.b16 %v134
    %v171 = vunpack.c.l.b16 %v135
    %v172 = vunpack.c.l.b16 %v136
    %v173 = vunpack.c.l.b16 %v137
    %v174 = vunpack.c.l.b16 %v138
    %v175 = vunpack.c.l.b16 %v139
    %v176 = vunpack.c.l.b16 %v140
    %v177 = vunpack.c.l.b16 %v141
    %v178 = vunpack.c.l.b16 %v142
    %v179 = vunpack.c.l.b16 %v143
    %v180 = vunpack.c.l.b16 %v144
    %v181 = vunpack.c.l.b16 %v145
    %v182 = vpack.c.b16 %v167, %v166
    %v183 = vpack.c.b16 %v169, %v168
    %v184 = vpack.c.b16 %v171, %v170
    %v185 = vpack.c.b16 %v173, %v172
    %v186 = vpack.c.b16 %v175, %v174
    %v187 = vpack.c.b16 %v177, %v176
    %v188 = vpack.c.b16 %v179, %v178
    %v189 = vpack.c.b16 %v181, %v180
    %198 = vmatpush.bf16.msra.mxu0 %v189
    %199 = vmatpush.bf16.msra.mxu0 %v188
    %200 = vmatpush.bf16.msra.mxu0 %v187
    %201 = vmatpush.bf16.msra.mxu0 %v186
    %202 = vmatpush.bf16.msra.mxu0 %v185
    %203 = vmatpush.bf16.msra.mxu0 %v184
    %204 = vmatpush.bf16.msra.mxu0 %v183
    %205 = vmatpush.bf16.msra.mxu0 %v182
    %206 = vmatmul.bf16.gmra.mxu0 %v129
    %v207 = vpop.f32.mrf.mxu0
    %v208 = vadd.f32 %v148, %v207
    %v209 = vpop.f32.mrf.mxu0
    %v210 = vadd.f32 %v148, %v209
    %211 = vdwg.mxu0
    %v212 = vpack.c.bf16 %v208, %v208
    %v213 = vpack.c.bf16 %v210, %v210
    %214 = vst [vmem:[#allocation8] sm:$0xf] %v212
    %215 = vst [vmem:[#allocation8 + $0x4] sm:$0xf] %v213
    %v216 = vlaneseq
    %v217 = vshrl.u32 %v216, 7
    %v218 = vadd.s32 %v217, 8
    %s219 = smul.u32 0, 16
    %v220 = vstv %s219
    %v221 = vadd.s32 %v217, %v220
    %v222 = vadd.s32 %v218, %v220
    %vm223 = vcmp.lt.s32.totalorder %v221, 8
    %vm224 = vcmp.lt.s32.totalorder %v222, 8
    %v225 = vsel %vm223, 1, 0
    %v226 = vsel %vm224, 1, 0
    %vm227 = vcmp.eq.s32.totalorder %v225, 1
    %vm228 = vcmp.eq.s32.totalorder %v226, 1
    %v229 = vsel %vm227, %v208, 0.0
    %v230 = vsel %vm228, %v210, 0.0
    %v231 = vadd.f32 %v229, %v230
    %v232 = vrot.slane %v231, 4
    %v233 = vadd.f32 %v231, %v232
    %v234 = vrot.slane %v233, 2
    %v235 = vadd.f32 %v233, %v234
    %v236 = vrot.slane %v235, 1
    %v237 = vadd.f32 %v235, %v236
    %v238 = vmul.f32 %v229, %v229
    %v239 = vmul.f32 %v230, %v230
    %v240 = vadd.f32 %v238, %v239
    %v241 = vrot.slane %v240, 4
    %v242 = vadd.f32 %v240, %v241
    %v243 = vrot.slane %v242, 2
    %v244 = vadd.f32 %v242, %v243
    %v245 = vrot.slane %v244, 1
    %v246 = vadd.f32 %v244, %v245
    %vm247 = vcmp.eq.s32.totalorder %v217, 0
    %v248 = vsel %vm247, %v237, %v246
    %249 = vst [vmem:[#allocation9] sm:$0x3] %v248
    // Predicated region
    $region34: #{tpu_custom_call.1} parent=1 // pred_check
      _
    $region35: #{tpu_custom_call.1} parent=1 // pred_check_branch
      %251 = sbr.rel (0) target = $region37
    $region36: #{tpu_custom_call.1} parent=1 // pred_region
      %253 = vsyncadd [#allocation4], 0
      %s254 = sshll.u32 [#allocation8], 4
      %s255 = int_to_ptr.vmem [resolvable:$true] %s254
      %s256 = sshll.u32 %s5, 4
      %s257 = int_to_ptr.hbm [resolvable:$true] %s256
      %262 = dma.vmem_to_hbm [thread:$0]  %s255, 128, %s257, [#allocation4], 64, 64, 4
    $region37: #{tpu_custom_call.1} parent=1 // pred_fallthru
      _
    // Predicated region
    $region38: #{tpu_custom_call.1} parent=1 // pred_check
      _
    $region39: #{tpu_custom_call.1} parent=1 // pred_check_branch
      %264 = sbr.rel (0) target = $region41
    $region40: #{tpu_custom_call.1} parent=1 // pred_region
      %266 = vsyncadd [#allocation10], 0
      %s268 = sshll.u32 [#allocation9], 4
      %s269 = int_to_ptr.vmem [resolvable:$true] %s268
      %s270 = sshll.u32 %s6, 4
      %s271 = int_to_ptr.hbm [resolvable:$true] %s270
      %273 = dma.vmem_to_hbm [thread:$0]  %s269, 32, %s271, [#allocation10]
    $region41: #{tpu_custom_call.1} parent=1 // pred_fallthru
      _
    // Predicated region
    $region42: #{tpu_custom_call.1} parent=1 // pred_check
      _
    $region43: #{tpu_custom_call.1} parent=1 // pred_check_branch
      %275 = sbr.rel (0) target = $region45
    $region44: #{tpu_custom_call.1} parent=1 // pred_region
      %277 = dma.done [#allocation4], 128
    $region45: #{tpu_custom_call.1} parent=1 // pred_fallthru
      _
    // Predicated region
    $region46: #{tpu_custom_call.1} parent=1 // pred_check
      _
    $region47: #{tpu_custom_call.1} parent=1 // pred_check_branch
      %279 = sbr.rel (0) target = $region49
    $region48: #{tpu_custom_call.1} parent=1 // pred_region
      %281 = dma.done [#allocation10], 32
    $region49: #{tpu_custom_call.1} parent=1 // pred_fallthru
      _
    %282 = vsyncpa [#allocation3], 1
    %283 = vsyncpa [#allocation6], 1
    %284 = vsyncpa [#allocation4], 1
    %285 = vsyncpa [#allocation10], 1

// kernel: tpu_custom_call.1
$region0: #{tpu_custom_call.1}
  #allocation0 [shape = 'u32[]', space=smem, size = 0x4, offset = 0x4, fixed_abs, tag = 'smem constant byte address 0x4 - core index']
  #allocation1 [shape = 'u32[72,128]{1,0:T(1,128)}', space=vmem, size = 0x9000, scoped, tag = 'internal scratch']
  %s0 = inlined_call_operand.hbm [shape: f32[16,128], index: 0, kind: input, shape index: {}]
  %s1 = inlined_call_operand.hbm [shape: f32[1,128], index: 1, kind: input, shape index: {}]
  %s2 = inlined_call_operand.vmem [shape: f32[1,128], index: 2, kind: input, shape index: {}]
  %s3 = inlined_call_operand.hbm [shape: bf16[128,128], index: 3, kind: input, shape index: {}]
  %s4 = inlined_call_operand.vmem [shape: f32[1,128], index: 4, kind: input, shape index: {}]
  %s5 = inlined_call_operand.hbm [shape: bf16[16,128], index: 5, kind: output, shape index: {0}]
  %s6 = inlined_call_operand.hbm [shape: f32[1,2,128], index: 6, kind: output, shape index: {1}]
  %7 = xla_tuple %s5, %s6
  %s8 = sld [smem:[#allocation0]]
  $region50: #{tpu_custom_call.1} parent=0
    _
  %s10 = ssub.s32 1, %s8
  %s11 = scalar_select 0, %s10, %s8
  $region1: #{tpu_custom_call.1} parent=0
    #allocation2 [shape = 'u8[8192]{0}', space=vmem, size = 0x2000, scoped, tag = 'input window, operand 0, single buffered']
    #allocation3 [shape = 's32[1]{0}', space=sflag, size = 0x4, scoped, tag = 'scoped memory for tpu_custom_call.1']
    #allocation4 [shape = 's32[1]{0}', space=sflag, size = 0x4, scoped, tag = 'scoped memory for tpu_custom_call.1']
    #allocation5 [shape = 'u8[512]{0}', space=vmem, size = 0x400, scoped, tag = 'input window, operand 1, single buffered']
    #allocation6 [shape = 's32[1]{0}', space=sflag, size = 0x4, scoped, tag = 'scoped memory for tpu_custom_call.1']
    #allocation7 [shape = 'u8[32768]{0}', space=vmem, size = 0x8000, scoped, tag = 'input window, operand 3, single buffered']
    #allocation8 [shape = 'u8[4096]{0}', space=vmem, size = 0x1000, scoped, tag = 'output window, operand 0, single buffered']
    #allocation9 [shape = 'u8[1024]{0}', space=vmem, size = 0x400, scoped, tag = 'output window, operand 1, single buffered']
    #allocation10 [shape = 's32[1]{0}', space=sflag, size = 0x4, scoped, tag = 'scoped memory for tpu_custom_call.1']
    %12 = vsyncpa [#allocation3], 0
    %13 = vsyncpa [#allocation6], 0
    %14 = vsyncpa [#allocation4], 0
    %15 = vsyncpa [#allocation10], 0
    // Predicated region
    $region2: #{tpu_custom_call.1} parent=1 // pred_check
      _
    $region3: #{tpu_custom_call.1} parent=1 // pred_check_branch
      %17 = sbr.rel (0) target = $region5
    $region4: #{tpu_custom_call.1} parent=1 // pred_region
      %19 = vsyncadd [#allocation3], 0
      %s20 = sshll.u32 %s0, 4
      %s21 = int_to_ptr.hbm [resolvable:$true] %s20
      %s22 = sshll.u32 [#allocation2], 4
      %s23 = int_to_ptr.vmem [resolvable:$true] %s22
      %28 = dma.hbm_to_vmem [thread:$0]  %s21, 256, %s23, [#allocation3], 128, 128, 8
    $region5: #{tpu_custom_call.1} parent=1 // pred_fallthru
      _
    // Predicated region
    $region6: #{tpu_custom_call.1} parent=1 // pred_check
      _
    $region7: #{tpu_custom_call.1} parent=1 // pred_check_branch
      %30 = sbr.rel (0) target = $region9
    $region8: #{tpu_custom_call.1} parent=1 // pred_region
      %32 = vsyncadd [#allocation6], 0
      %s34 = sshll.u32 %s1, 4
      %s35 = int_to_ptr.hbm [resolvable:$true] %s34
      %s36 = sshll.u32 [#allocation5], 4
      %s37 = int_to_ptr.vmem [resolvable:$true] %s36
      %39 = dma.hbm_to_vmem [thread:$0]  %s35, 16, %s37, [#allocation6]
    $region9: #{tpu_custom_call.1} parent=1 // pred_fallthru
      _
    // Predicated region
    $region10: #{tpu_custom_call.1} parent=1 // pred_check
      _
    $region11: #{tpu_custom_call.1} parent=1 // pred_check_branch
      %41 = sbr.rel (0) target = $region13
    $region12: #{tpu_custom_call.1} parent=1 // pred_region
      _
    $region13: #{tpu_custom_call.1} parent=1 // pred_fallthru
      _
    // Predicated region
    $region14: #{tpu_custom_call.1} parent=1 // pred_check
      _
    $region15: #{tpu_custom_call.1} parent=1 // pred_check_branch
      %43 = sbr.rel (0) target = $region17
    $region16: #{tpu_custom_call.1} parent=1 // pred_region
      %45 = vsyncadd [#allocation6], 0
      %s46 = sshll.u32 %s3, 4
      %s47 = int_to_ptr.hbm [resolvable:$true] %s46
      %s48 = sshll.u32 [#allocation7], 4
      %s49 = int_to_ptr.vmem [resolvable:$true] %s48
      %54 = dma.hbm_to_vmem [thread:$0]  %s47, 1024, %s49, [#allocation6], 64, 64, 4
    $region17: #{tpu_custom_call.1} parent=1 // pred_fallthru
      _
    // Predicated region
    $region18: #{tpu_custom_call.1} parent=1 // pred_check
      _
    $region19: #{tpu_custom_call.1} parent=1 // pred_check_branch
      %56 = sbr.rel (0) target = $region21
    $region20: #{tpu_custom_call.1} parent=1 // pred_region
      _
    $region21: #{tpu_custom_call.1} parent=1 // pred_fallthru
      _
    // Predicated region
    $region22: #{tpu_custom_call.1} parent=1 // pred_check
      _
    $region23: #{tpu_custom_call.1} parent=1 // pred_check_branch
      %58 = sbr.rel (0) target = $region25
    $region24: #{tpu_custom_call.1} parent=1 // pred_region
      %60 = dma.done [#allocation3], 256
    $region25: #{tpu_custom_call.1} parent=1 // pred_fallthru
      _
    // Predicated region
    $region26: #{tpu_custom_call.1} parent=1 // pred_check
      _
    $region27: #{tpu_custom_call.1} parent=1 // pred_check_branch
      %62 = sbr.rel (0) target = $region29
    $region28: #{tpu_custom_call.1} parent=1 // pred_region
      %64 = dma.done [#allocation6], 16
    $region29: #{tpu_custom_call.1} parent=1 // pred_fallthru
      _
    // Predicated region
    $region30: #{tpu_custom_call.1} parent=1 // pred_check
      _
    $region31: #{tpu_custom_call.1} parent=1 // pred_check_branch
      %66 = sbr.rel (0) target = $region33
    $region32: #{tpu_custom_call.1} parent=1 // pred_region
      %68 = dma.done [#allocation6], 1024
    $region33: #{tpu_custom_call.1} parent=1 // pred_fallthru
      _
    %v69 = vld [vmem:[#allocation2] sm:$0xff]
    %v70 = vld [vmem:[#allocation2 + $0x8] sm:$0xff]
    %71 = vadd.xlane.f32.xlu0 %v69
    %v72 = vpop.xlane.xlu0 %71
    %73 = vadd.xlane.f32.xlu0 %v70
    %v74 = vpop.xlane.xlu0 %73
    %v75 = vmul.f32 %v72, 0.03125
    %v76 = vmul.f32 %v74, 0.03125
    %v77 = vmul.f32 %v69, %v69
    %v78 = vmul.f32 %v70, %v70
    %79 = vadd.xlane.f32.xlu0 %v77
    %v80 = vpop.xlane.xlu0 %79
    %81 = vadd.xlane.f32.xlu0 %v78
    %v82 = vpop.xlane.xlu0 %81
    %v83 = vmul.f32 %v80, 0.03125
    %v84 = vmul.f32 %v82, 0.03125
    %v85 = vmul.f32 %v75, %v75
    %v86 = vmul.f32 %v76, %v76
    %v87 = vsub.f32 %v83, %v85
    %v88 = vsub.f32 %v84, %v86
    %v89 = vmax.f32 %v87, 0.0
    %v90 = vmax.f32 %v88, 0.0
    %v91 = vsub.f32 %v69, %v75
    %v92 = vsub.f32 %v70, %v76
    %v93 = vadd.f32 %v89, 1e-05
    %v94 = vadd.f32 %v90, 1e-05
    %v95 = vrsqrt.pop %v93
    %v96 = vmul.f32 %v95, %v93
    %v97 = vmul.f32 %v96, %v95
    %v98 = vmul.f32 0.5, %v97
    %v99 = vsub.f32 1.5, %v98
    %v100 = vmul.f32 %v95, %v99
    %vm101 = vweird.f32 %v93
    %vm102 = vweird.f32 %v95
    %vm103 = vmor %vm101, %vm102
    %v104 = vsel %vm103, %v95, %v100
    %v105 = vrsqrt.pop %v94
    %v106 = vmul.f32 %v105, %v94
    %v107 = vmul.f32 %v106, %v105
    %v108 = vmul.f32 0.5, %v107
    %v109 = vsub.f32 1.5, %v108
    %v110 = vmul.f32 %v105, %v109
    %vm111 = vweird.f32 %v94
    %vm112 = vweird.f32 %v105
    %vm113 = vmor %vm111, %vm112
    %v114 = vsel %vm113, %v105, %v110
    %v115 = vmul.f32 %v91, %v104
    %v116 = vmul.f32 %v92, %v114
    %v117 = vld [vmem:[#allocation5] sm:$0x1]
    %v119 = vperm.slane %v117, 0
    %v121 = vmul.f32 %v115, %v119
    %v122 = vmul.f32 %v116, %v119
    %v123 = vld [vmem:[%s2] sm:$0x1]
    %v125 = vperm.slane %v123, 0
    %v127 = vadd.f32 %v121, %v125
    %v128 = vadd.f32 %v122, %v125
    %v129 = vpack.c.bf16 %v128, %v127
    %v130 = vld [vmem:[#allocation7] sm:$0xf]
    %v131 = vld [vmem:[#allocation7 + $0x4] sm:$0xf]
    %v132 = vld [vmem:[#allocation7 + $0x8] sm:$0xf]
    %v133 = vld [vmem:[#allocation7 + $0xc] sm:$0xf]
    %v134 = vld [vmem:[#allocation7 + $0x10] sm:$0xf]
    %v135 = vld [vmem:[#allocation7 + $0x14] sm:$0xf]
    %v136 = vld [vmem:[#allocation7 + $0x18] sm:$0xf]
    %v137 = vld [vmem:[#allocation7 + $0x1c] sm:$0xf]
    %v138 = vld [vmem:[#allocation7 + $0x20] sm:$0xf]
    %v139 = vld [vmem:[#allocation7 + $0x24] sm:$0xf]
    %v140 = vld [vmem:[#allocation7 + $0x28] sm:$0xf]
    %v141 = vld [vmem:[#allocation7 + $0x2c] sm:$0xf]
    %v142 = vld [vmem:[#allocation7 + $0x30] sm:$0xf]
    %v143 = vld [vmem:[#allocation7 + $0x34] sm:$0xf]
    %v144 = vld [vmem:[#allocation7 + $0x38] sm:$0xf]
    %v145 = vld [vmem:[#allocation7 + $0x3c] sm:$0xf]
    %v146 = vld [vmem:[%s4] sm:$0x1]
    %v148 = vperm.slane %v146, 0
    %v166 = vunpack.c.l.b16 %v130
    %v167 = vunpack.c.l.b16 %v131
    %v168 = vunpack.c.l.b16 %v132
    %v169 = vunpack.c.l.b16 %v133
    %v170 = vunpack.c.l.b16 %v134
    %v171 = vunpack.c.l.b16 %v135
    %v172 = vunpack.c.l.b16 %v136
    %v173 = vunpack.c.l.b16 %v137
    %v174 = vunpack.c.l.b16 %v138
    %v175 = vunpack.c.l.b16 %v139
    %v176 = vunpack.c.l.b16 %v140
    %v177 = vunpack.c.l.b16 %v141
    %v178 = vunpack.c.l.b16 %v142
    %v179 = vunpack.c.l.b16 %v143
    %v180 = vunpack.c.l.b16 %v144
    %v181 = vunpack.c.l.b16 %v145
    %v182 = vpack.c.b16 %v167, %v166
    %v183 = vpack.c.b16 %v169, %v168
    %v184 = vpack.c.b16 %v171, %v170
    %v185 = vpack.c.b16 %v173, %v172
    %v186 = vpack.c.b16 %v175, %v174
    %v187 = vpack.c.b16 %v177, %v176
    %v188 = vpack.c.b16 %v179, %v178
    %v189 = vpack.c.b16 %v181, %v180
    %198 = vmatpush.bf16.msra.mxu0 %v189
    %199 = vmatpush.bf16.msra.mxu0 %v188
    %200 = vmatpush.bf16.msra.mxu0 %v187
    %201 = vmatpush.bf16.msra.mxu0 %v186
    %202 = vmatpush.bf16.msra.mxu0 %v185
    %203 = vmatpush.bf16.msra.mxu0 %v184
    %204 = vmatpush.bf16.msra.mxu0 %v183
    %205 = vmatpush.bf16.msra.mxu0 %v182
    %206 = vmatmul.bf16.gmra.mxu0 %v129
    %v207 = vpop.f32.mrf.mxu0
    %v208 = vadd.f32 %v148, %v207
    %v209 = vpop.f32.mrf.mxu0
    %v210 = vadd.f32 %v148, %v209
    %211 = vdwg.mxu0
    %v212 = vpack.c.bf16 %v208, %v208
    %v213 = vpack.c.bf16 %v210, %v210
    %214 = vst [vmem:[#allocation8] sm:$0xf] %v212
    %215 = vst [vmem:[#allocation8 + $0x4] sm:$0xf] %v213
    %v216 = vlaneseq
    %v217 = vshrl.u32 %v216, 7
    %v218 = vadd.s32 %v217, 8
    %s219 = smul.u32 0, 16
    %v220 = vstv %s219
    %v221 = vadd.s32 %v217, %v220
    %v222 = vadd.s32 %v218, %v220
    %vm223 = vcmp.lt.s32.totalorder %v221, 8
    %vm224 = vcmp.lt.s32.totalorder %v222, 8
    %v225 = vsel %vm223, 1, 0
    %v226 = vsel %vm224, 1, 0
    %vm227 = vcmp.eq.s32.totalorder %v225, 1
    %vm228 = vcmp.eq.s32.totalorder %v226, 1
    %v229 = vsel %vm227, %v208, 0.0
    %v230 = vsel %vm228, %v210, 0.0
    %v231 = vadd.f32 %v229, %v230
    %v232 = vrot.slane %v231, 4
    %v233 = vadd.f32 %v231, %v232
    %v234 = vrot.slane %v233, 2
    %v235 = vadd.f32 %v233, %v234
    %v236 = vrot.slane %v235, 1
    %v237 = vadd.f32 %v235, %v236
    %v238 = vmul.f32 %v229, %v229
    %v239 = vmul.f32 %v230, %v230
    %v240 = vadd.f32 %v238, %v239
    %v241 = vrot.slane %v240, 4
    %v242 = vadd.f32 %v240, %v241
    %v243 = vrot.slane %v242, 2
    %v244 = vadd.f32 %v242, %v243
    %v245 = vrot.slane %v244, 1
    %v246 = vadd.f32 %v244, %v245
    %vm247 = vcmp.eq.s32.totalorder %v217, 0
    %v248 = vsel %vm247, %v237, %v246
    %249 = vst [vmem:[#allocation9] sm:$0x3] %v248
    // Predicated region
    $region34: #{tpu_custom_call.1} parent=1 // pred_check
      _
    $region35: #{tpu_custom_call.1} parent=1 // pred_check_branch
      %251 = sbr.rel (0) target = $region37
    $region36: #{tpu_custom_call.1} parent=1 // pred_region
      %253 = vsyncadd [#allocation4], 0
      %s254 = sshll.u32 [#allocation8], 4
      %s255 = int_to_ptr.vmem [resolvable:$true] %s254
      %s256 = sshll.u32 %s5, 4
      %s257 = int_to_ptr.hbm [resolvable:$true] %s256
      %262 = dma.vmem_to_hbm [thread:$0]  %s255, 128, %s257, [#allocation4], 64, 64, 4
    $region37: #{tpu_custom_call.1} parent=1 // pred_fallthru
      _
    // Predicated region
    $region38: #{tpu_custom_call.1} parent=1 // pred_check
      _
    $region39: #{tpu_custom_call.1} parent=1 // pred_check_branch
      %264 = sbr.rel (0) target = $region41
    $region40: #{tpu_custom_call.1} parent=1 // pred_region
      %266 = vsyncadd [#allocation10], 0
      %s268 = sshll.u32 [#allocation9], 4
      %s269 = int_to_ptr.vmem [resolvable:$true] %s268
      %s270 = sshll.u32 %s6, 4
      %s271 = int_to_ptr.hbm [resolvable:$true] %s270
      %273 = dma.vmem_to_hbm [thread:$0]  %s269, 32, %s271, [#allocation10]
    $region41: #{tpu_custom_call.1} parent=1 // pred_fallthru
      _
    // Predicated region
    $region42: #{tpu_custom_call.1} parent=1 // pred_check
      _
    $region43: #{tpu_custom_call.1} parent=1 // pred_check_branch
      %275 = sbr.rel (0) target = $region45
    $region44: #{tpu_custom_call.1} parent=1 // pred_region
      %277 = dma.done [#allocation4], 128
    $region45: #{tpu_custom_call.1} parent=1 // pred_fallthru
      _
    // Predicated region
    $region46: #{tpu_custom_call.1} parent=1 // pred_check
      _
    $region47: #{tpu_custom_call.1} parent=1 // pred_check_branch
      %279 = sbr.rel (0) target = $region49
    $region48: #{tpu_custom_call.1} parent=1 // pred_region
      %281 = dma.done [#allocation10], 32
    $region49: #{tpu_custom_call.1} parent=1 // pred_fallthru
      _
    %282 = vsyncpa [#allocation3], 1
    %283 = vsyncpa [#allocation6], 1
    %284 = vsyncpa [#allocation4], 1
    %285 = vsyncpa [#allocation10], 1

</llo_original>
